<compile_context>
chip_gen: v6e
topology: v6e:2x2x1
jax: 0.10.0
libtpu: 0.0.40
codegen_flags: <defaults>
</compile_context>

<pallas_src>
import jax
import jax.numpy as jnp
from jax import lax
from jax.experimental import pallas as pl
from jax.experimental.pallas import tpu as pltpu

EPS = 1e-5  # PyTorch InstanceNorm2d default


def _upblock_kernel(p_ref, w_ref, o_ref):
    """Per-sample fused (4-phase transposed-conv matmul) + InstanceNorm + ReLU.

    p_ref: (1, 4, K, HW)    bf16 per-phase patches (K = Cin*4), spatial HW on lanes
    w_ref: (4, Cout, K)     bf16 per-phase weights
    o_ref: (1, 4, Cout, HW) f32 output, phase-major (interleaved back to NCHW by the wrapper)
    """
    cout = o_ref.shape[2]
    hw = o_ref.shape[3]
    inv_n = 1.0 / (4.0 * hw)

    # Pass 1: MXU matmuls per phase (bf16 in, f32 accumulate). Stash un-normalized
    # activations in the output block and accumulate per-channel sums (lane reduction).
    ssum = jnp.zeros((cout, 1), jnp.float32)
    for p in range(4):
        y = jnp.dot(w_ref[p], p_ref[0, p],
                    preferred_element_type=jnp.float32)      # (Cout, HW)
        o_ref[0, p] = y
        ssum = ssum + jnp.sum(y, axis=1, keepdims=True)
    mean = ssum * inv_n

    # Pass 2: centered sum of squares (two-pass variance -> no cancellation issues).
    ssq = jnp.zeros((cout, 1), jnp.float32)
    for p in range(4):
        d = o_ref[0, p] - mean
        ssq = ssq + jnp.sum(d * d, axis=1, keepdims=True)
    inv_std = lax.rsqrt(ssq * inv_n + EPS)                    # EUP rsqrt

    # Pass 3: normalize + ReLU; lane-dense (HW-last) unmasked stores.
    for p in range(4):
        o_ref[0, p] = jnp.maximum((o_ref[0, p] - mean) * inv_std, 0.0).astype(o_ref.dtype)


def _make_phase_patches(x):
    """x: (N, Cin, H, W) -> patches (N, 4, Cin*4, H*W).

    Phase (py, px) produces output pixels (2a+py, 2b+px); its 2x2 taps are
    x[a + py + ty - 1, b + px + tx - 1], ty, tx in {0, 1} (zero padded at the border).
    K-order is (ci, ty, tx); spatial (a, b) is flattened last so it lands on lanes.
    """
    n, c, h, w = x.shape
    xp = jnp.pad(x, ((0, 0), (0, 0), (1, 1), (1, 1)))
    phases = []
    for py in range(2):
        for px in range(2):
            taps = [xp[:, :, py + ty: py + ty + h, px + tx: px + tx + w]
                    for ty in range(2) for tx in range(2)]
            ph = jnp.stack(taps, axis=2)                      # (N, Cin, 4, H, W)
            phases.append(ph.reshape(n, c * 4, h * w))
    return jnp.stack(phases, axis=1)                          # (N, 4, Cin*4, H*W)


def _make_phase_weights(w):
    """ConvTranspose2d weight (Cin, Cout, 4, 4) -> (4, Cout, Cin*4).

    For phase (py, px), tap (ty, tx) uses kernel element (3 - py - 2*ty, 3 - px - 2*tx);
    row order matches the (ci, ty, tx) patch K-order.
    """
    cin, cout = w.shape[0], w.shape[1]
    phases = []
    for py in range(2):
        for px in range(2):
            wp = w[:, :, 3 - py::-2, 3 - px::-2]              # (Cin, Cout, 2, 2)
            phases.append(wp.transpose(1, 0, 2, 3).reshape(cout, cin * 4))
    return jnp.stack(phases, axis=0)                          # (4, Cout, Cin*4)


@jax.jit
def unet_upblock_forward(x, w, b):
    """x: (N, Cin, H, W), w: (Cin, Cout, 4, 4), b: (Cout,) -> (N, Cout, 2H, 2W)."""
    del b  # bias cancels exactly under non-affine InstanceNorm (mean subtracted right after)
    n, c_in, h, wd = x.shape
    c_out = w.shape[1]
    hw = h * wd
    k = c_in * 4

    # bf16 MXU inputs (f32 accumulation inside the kernel).
    patches = _make_phase_patches(x.astype(jnp.bfloat16))     # (N, 4, K, HW)
    wmat = _make_phase_weights(w.astype(jnp.bfloat16))        # (4, Cout, K)

    # TODO(synk): for very large H*W (per-sample block exceeding VMEM) tile the HW axis with a
    # stats-accumulator pass + second normalize sweep, and assemble patches in-kernel from a
    # halo'd input tile instead of materializing them in HBM.
    flops = 2 * n * 4 * hw * k * c_out
    bytes_accessed = patches.size * 2 + wmat.size * 2 + n * 4 * c_out * hw * 4

    out = pl.pallas_call(
        _upblock_kernel,
        out_shape=jax.ShapeDtypeStruct((n, 4, c_out, hw), jnp.float32),
        grid_spec=pltpu.PrefetchScalarGridSpec(
            num_scalar_prefetch=0,
            grid=(n,),
            in_specs=[
                pl.BlockSpec((1, 4, k, hw), lambda i: (i, 0, 0, 0)),
                pl.BlockSpec((4, c_out, k), lambda i: (0, 0, 0)),
            ],
            out_specs=pl.BlockSpec((1, 4, c_out, hw), lambda i: (i, 0, 0, 0)),
        ),
        compiler_params=pltpu.CompilerParams(
            dimension_semantics=("parallel",),
            vmem_limit_bytes=48 * 1024 * 1024,
        ),
        cost_estimate=pl.CostEstimate(
            flops=flops, transcendentals=n * c_out, bytes_accessed=bytes_accessed),
    )(patches, wmat)

    # Phase-major (N, py, px, Cout, H, W) -> interleave to NCHW (N, Cout, 2H, 2W).
    out = out.reshape(n, 2, 2, c_out, h, wd)
    out = out.transpose(0, 3, 4, 1, 5, 2)                     # (n, co, a, py, b, px)
    return out.reshape(n, c_out, 2 * h, 2 * wd)


def _reference_forward(x, w, b):
    """Pure-JAX reference of the PyTorch module (f32) for verification."""
    x = x.astype(jnp.float32)
    # ConvTranspose2d(k=4, s=2, p=1) == conv(lhs_dilation=2, pad=2, flipped kernel)
    w_oihw = jnp.flip(w, (2, 3)).transpose(1, 0, 2, 3).astype(jnp.float32)  # (Cout, Cin, 4, 4)
    y = lax.conv_general_dilated(
        x, w_oihw, window_strides=(1, 1), padding=[(2, 2), (2, 2)],
        lhs_dilation=(2, 2), rhs_dilation=(1, 1),
        dimension_numbers=("NCHW", "OIHW", "NCHW"))
    y = y + b.reshape(1, -1, 1, 1)
    mean = jnp.mean(y, axis=(2, 3), keepdims=True)
    var = jnp.mean((y - mean) ** 2, axis=(2, 3), keepdims=True)
    y = (y - mean) * lax.rsqrt(var + EPS)
    return jnp.maximum(y, 0.0)


if __name__ == "__main__":
    # Small shapes: batch=2, inner_nc=4, outer_nc=8, spatial 16x16 -> output 32x32.
    N, C_in, C_out, H, W = 2, 4, 8, 16, 16

    key = jax.random.PRNGKey(0)
    kx, kw, kb = jax.random.split(key, 3)
    x = jax.random.normal(kx, (N, C_in, H, W), dtype=jnp.float32)
    # ConvTranspose2d weight shape: (in_channels, out_channels, kH, kW)
    fan = C_in * 4 * 4
    bound = 1.0 / (fan ** 0.5)
    w = jax.random.uniform(kw, (C_in, C_out, 4, 4), jnp.float32, -bound, bound)
    b = jax.random.uniform(kb, (C_out,), jnp.float32, -bound, bound)

    out = jax.block_until_ready(unet_upblock_forward(x, w, b))
    assert out.shape == (N, C_out, 2 * H, 2 * W), out.shape

    # Compare against the f32 reference run on bf16-rounded conv inputs (the kernel feeds the
    # MXU bf16 operands with f32 accumulation); InstanceNorm/ReLU math is f32 on both sides.
    x_q = x.astype(jnp.bfloat16).astype(jnp.float32)
    w_q = w.astype(jnp.bfloat16).astype(jnp.float32)
    ref = jax.block_until_ready(_reference_forward(x_q, w_q, b))
    if not jnp.allclose(out, ref, atol=2e-3, rtol=2e-3):
        err = jnp.max(jnp.abs(out - ref))
        raise AssertionError(f"Pallas kernel output mismatch vs reference (max |err| = {err})")

    print("KERNEL_OK")
</pallas_src>

<mosaic_0001>
module attributes {stable_mosaic.version = 11 : i64} {
  func.func @_upblock_kernel(%arg0: i32, %arg1: memref<1x4x16x256xbf16, #tpu.memory_space<vmem>>, %arg2: memref<4x8x16xbf16, #tpu.memory_space<vmem>>, %arg3: memref<1x4x8x256xf32, #tpu.memory_space<vmem>>) attributes {dimension_semantics = [#tpu.dimension_semantics<parallel>], iteration_bounds = array<i64: 2>, scalar_prefetch = 0 : i64, scratch_operands = 0 : i64, tpu.core_type = #tpu.core_type<tc>, window_params = [{transform_indices = @transform_0, window_bounds = array<i64: 1, 4, 16, 256>}, {pipeline_mode = #tpu.pipeline_mode<synchronous>, transform_indices = @transform_1, window_bounds = array<i64: 4, 8, 16>}, {transform_indices = @transform_2, window_bounds = array<i64: 1, 4, 8, 256>}]} {
    %cst = arith.constant 0.000000e+00 : f32
    %0 = vector.broadcast %cst : f32 to vector<8x1xf32>
    %c0 = arith.constant 0 : index
    %c0_0 = arith.constant 0 : index
    %c0_1 = arith.constant 0 : index
    %1 = vector.load %arg2[%c0, %c0_0, %c0_1] : memref<4x8x16xbf16, #tpu.memory_space<vmem>>, vector<1x8x16xbf16>
    %2 = vector.shape_cast %1 : vector<1x8x16xbf16> to vector<8x16xbf16>
    %c0_2 = arith.constant 0 : index
    %c0_3 = arith.constant 0 : index
    %c0_4 = arith.constant 0 : index
    %c0_5 = arith.constant 0 : index
    %3 = vector.load %arg1[%c0_2, %c0_3, %c0_4, %c0_5] : memref<1x4x16x256xbf16, #tpu.memory_space<vmem>>, vector<1x1x16x256xbf16>
    %4 = vector.shape_cast %3 : vector<1x1x16x256xbf16> to vector<16x256xbf16>
    %cst_6 = arith.constant dense<0.000000e+00> : vector<8x256xf32>
    %5 = tpu.matmul %2, %4, %cst_6 {dimension_numbers = #tpu.dot_dimension_numbers<[1], [0], [0], [1], [0, 0, 1, 1], [], []>} : vector<8x16xbf16>, vector<16x256xbf16>, vector<8x256xf32> -> vector<8x256xf32>
    %c0_7 = arith.constant 0 : index
    %c0_8 = arith.constant 0 : index
    %c0_9 = arith.constant 0 : index
    %c0_10 = arith.constant 0 : index
    %6 = vector.load %arg3[%c0_7, %c0_8, %c0_9, %c0_10] : memref<1x4x8x256xf32, #tpu.memory_space<vmem>>, vector<1x1x8x256xf32>
    %7 = vector.shape_cast %6 : vector<1x1x8x256xf32> to vector<8x256xf32>
    %8 = vector.shape_cast %5 : vector<8x256xf32> to vector<1x1x8x256xf32>
    tpu.vector_store %arg3[%c0_7, %c0_8, %c0_9, %c0_10], %8 {strides = array<i32>} : memref<1x4x8x256xf32, #tpu.memory_space<vmem>>, vector<1x1x8x256xf32>,
    %cst_11 = arith.constant dense<0.000000e+00> : vector<8xf32>
    %9 = vector.multi_reduction <add>, %5, %cst_11 [1] : vector<8x256xf32> to vector<8xf32>
    %10 = vector.shape_cast %9 : vector<8xf32> to vector<8x1xf32>
    %11 = arith.addf %0, %10 : vector<8x1xf32>
    %c1 = arith.constant 1 : index
    %c0_12 = arith.constant 0 : index
    %c0_13 = arith.constant 0 : index
    %12 = vector.load %arg2[%c1, %c0_12, %c0_13] : memref<4x8x16xbf16, #tpu.memory_space<vmem>>, vector<1x8x16xbf16>
    %13 = vector.shape_cast %12 : vector<1x8x16xbf16> to vector<8x16xbf16>
    %c0_14 = arith.constant 0 : index
    %c1_15 = arith.constant 1 : index
    %c0_16 = arith.constant 0 : index
    %c0_17 = arith.constant 0 : index
    %14 = vector.load %arg1[%c0_14, %c1_15, %c0_16, %c0_17] : memref<1x4x16x256xbf16, #tpu.memory_space<vmem>>, vector<1x1x16x256xbf16>
    %15 = vector.shape_cast %14 : vector<1x1x16x256xbf16> to vector<16x256xbf16>
    %cst_18 = arith.constant dense<0.000000e+00> : vector<8x256xf32>
    %16 = tpu.matmul %13, %15, %cst_18 {dimension_numbers = #tpu.dot_dimension_numbers<[1], [0], [0], [1], [0, 0, 1, 1], [], []>} : vector<8x16xbf16>, vector<16x256xbf16>, vector<8x256xf32> -> vector<8x256xf32>
    %c0_19 = arith.constant 0 : index
    %c1_20 = arith.constant 1 : index
    %c0_21 = arith.constant 0 : index
    %c0_22 = arith.constant 0 : index
    %17 = vector.load %arg3[%c0_19, %c1_20, %c0_21, %c0_22] : memref<1x4x8x256xf32, #tpu.memory_space<vmem>>, vector<1x1x8x256xf32>
    %18 = vector.shape_cast %17 : vector<1x1x8x256xf32> to vector<8x256xf32>
    %19 = vector.shape_cast %16 : vector<8x256xf32> to vector<1x1x8x256xf32>
    tpu.vector_store %arg3[%c0_19, %c1_20, %c0_21, %c0_22], %19 {strides = array<i32>} : memref<1x4x8x256xf32, #tpu.memory_space<vmem>>, vector<1x1x8x256xf32>,
    %cst_23 = arith.constant dense<0.000000e+00> : vector<8xf32>
    %20 = vector.multi_reduction <add>, %16, %cst_23 [1] : vector<8x256xf32> to vector<8xf32>
    %21 = vector.shape_cast %20 : vector<8xf32> to vector<8x1xf32>
    %22 = arith.addf %11, %21 : vector<8x1xf32>
    %c2 = arith.constant 2 : index
    %c0_24 = arith.constant 0 : index
    %c0_25 = arith.constant 0 : index
    %23 = vector.load %arg2[%c2, %c0_24, %c0_25] : memref<4x8x16xbf16, #tpu.memory_space<vmem>>, vector<1x8x16xbf16>
    %24 = vector.shape_cast %23 : vector<1x8x16xbf16> to vector<8x16xbf16>
    %c0_26 = arith.constant 0 : index
    %c2_27 = arith.constant 2 : index
    %c0_28 = arith.constant 0 : index
    %c0_29 = arith.constant 0 : index
    %25 = vector.load %arg1[%c0_26, %c2_27, %c0_28, %c0_29] : memref<1x4x16x256xbf16, #tpu.memory_space<vmem>>, vector<1x1x16x256xbf16>
    %26 = vector.shape_cast %25 : vector<1x1x16x256xbf16> to vector<16x256xbf16>
    %cst_30 = arith.constant dense<0.000000e+00> : vector<8x256xf32>
    %27 = tpu.matmul %24, %26, %cst_30 {dimension_numbers = #tpu.dot_dimension_numbers<[1], [0], [0], [1], [0, 0, 1, 1], [], []>} : vector<8x16xbf16>, vector<16x256xbf16>, vector<8x256xf32> -> vector<8x256xf32>
    %c0_31 = arith.constant 0 : index
    %c2_32 = arith.constant 2 : index
    %c0_33 = arith.constant 0 : index
    %c0_34 = arith.constant 0 : index
    %28 = vector.load %arg3[%c0_31, %c2_32, %c0_33, %c0_34] : memref<1x4x8x256xf32, #tpu.memory_space<vmem>>, vector<1x1x8x256xf32>
    %29 = vector.shape_cast %28 : vector<1x1x8x256xf32> to vector<8x256xf32>
    %30 = vector.shape_cast %27 : vector<8x256xf32> to vector<1x1x8x256xf32>
    tpu.vector_store %arg3[%c0_31, %c2_32, %c0_33, %c0_34], %30 {strides = array<i32>} : memref<1x4x8x256xf32, #tpu.memory_space<vmem>>, vector<1x1x8x256xf32>,
    %cst_35 = arith.constant dense<0.000000e+00> : vector<8xf32>
    %31 = vector.multi_reduction <add>, %27, %cst_35 [1] : vector<8x256xf32> to vector<8xf32>
    %32 = vector.shape_cast %31 : vector<8xf32> to vector<8x1xf32>
    %33 = arith.addf %22, %32 : vector<8x1xf32>
    %c3 = arith.constant 3 : index
    %c0_36 = arith.constant 0 : index
    %c0_37 = arith.constant 0 : index
    %34 = vector.load %arg2[%c3, %c0_36, %c0_37] : memref<4x8x16xbf16, #tpu.memory_space<vmem>>, vector<1x8x16xbf16>
    %35 = vector.shape_cast %34 : vector<1x8x16xbf16> to vector<8x16xbf16>
    %c0_38 = arith.constant 0 : index
    %c3_39 = arith.constant 3 : index
    %c0_40 = arith.constant 0 : index
    %c0_41 = arith.constant 0 : index
    %36 = vector.load %arg1[%c0_38, %c3_39, %c0_40, %c0_41] : memref<1x4x16x256xbf16, #tpu.memory_space<vmem>>, vector<1x1x16x256xbf16>
    %37 = vector.shape_cast %36 : vector<1x1x16x256xbf16> to vector<16x256xbf16>
    %cst_42 = arith.constant dense<0.000000e+00> : vector<8x256xf32>
    %38 = tpu.matmul %35, %37, %cst_42 {dimension_numbers = #tpu.dot_dimension_numbers<[1], [0], [0], [1], [0, 0, 1, 1], [], []>} : vector<8x16xbf16>, vector<16x256xbf16>, vector<8x256xf32> -> vector<8x256xf32>
    %c0_43 = arith.constant 0 : index
    %c3_44 = arith.constant 3 : index
    %c0_45 = arith.constant 0 : index
    %c0_46 = arith.constant 0 : index
    %39 = vector.load %arg3[%c0_43, %c3_44, %c0_45, %c0_46] : memref<1x4x8x256xf32, #tpu.memory_space<vmem>>, vector<1x1x8x256xf32>
    %40 = vector.shape_cast %39 : vector<1x1x8x256xf32> to vector<8x256xf32>
    %41 = vector.shape_cast %38 : vector<8x256xf32> to vector<1x1x8x256xf32>
    tpu.vector_store %arg3[%c0_43, %c3_44, %c0_45, %c0_46], %41 {strides = array<i32>} : memref<1x4x8x256xf32, #tpu.memory_space<vmem>>, vector<1x1x8x256xf32>,
    %cst_47 = arith.constant dense<0.000000e+00> : vector<8xf32>
    %42 = vector.multi_reduction <add>, %38, %cst_47 [1] : vector<8x256xf32> to vector<8xf32>
    %43 = vector.shape_cast %42 : vector<8xf32> to vector<8x1xf32>
    %44 = arith.addf %33, %43 : vector<8x1xf32>
    %cst_48 = arith.constant 9.765625E-4 : f32
    %45 = vector.broadcast %cst_48 : f32 to vector<8x1xf32>
    %46 = arith.mulf %44, %45 : vector<8x1xf32>
    %cst_49 = arith.constant 0.000000e+00 : f32
    %47 = vector.broadcast %cst_49 : f32 to vector<8x1xf32>
    %c0_50 = arith.constant 0 : index
    %c0_51 = arith.constant 0 : index
    %c0_52 = arith.constant 0 : index
    %c0_53 = arith.constant 0 : index
    %48 = vector.load %arg3[%c0_50, %c0_51, %c0_52, %c0_53] : memref<1x4x8x256xf32, #tpu.memory_space<vmem>>, vector<1x1x8x256xf32>
    %49 = vector.shape_cast %48 : vector<1x1x8x256xf32> to vector<8x256xf32>
    %50 = vector.broadcast %46 : vector<8x1xf32> to vector<8x256xf32>
    %51 = arith.subf %49, %50 : vector<8x256xf32>
    %52 = arith.mulf %51, %51 : vector<8x256xf32>
    %cst_54 = arith.constant dense<0.000000e+00> : vector<8xf32>
    %53 = vector.multi_reduction <add>, %52, %cst_54 [1] : vector<8x256xf32> to vector<8xf32>
    %54 = vector.shape_cast %53 : vector<8xf32> to vector<8x1xf32>
    %55 = arith.addf %47, %54 : vector<8x1xf32>
    %c0_55 = arith.constant 0 : index
    %c1_56 = arith.constant 1 : index
    %c0_57 = arith.constant 0 : index
    %c0_58 = arith.constant 0 : index
    %56 = vector.load %arg3[%c0_55, %c1_56, %c0_57, %c0_58] : memref<1x4x8x256xf32, #tpu.memory_space<vmem>>, vector<1x1x8x256xf32>
    %57 = vector.shape_cast %56 : vector<1x1x8x256xf32> to vector<8x256xf32>
    %58 = vector.broadcast %46 : vector<8x1xf32> to vector<8x256xf32>
    %59 = arith.subf %57, %58 : vector<8x256xf32>
    %60 = arith.mulf %59, %59 : vector<8x256xf32>
    %cst_59 = arith.constant dense<0.000000e+00> : vector<8xf32>
    %61 = vector.multi_reduction <add>, %60, %cst_59 [1] : vector<8x256xf32> to vector<8xf32>
    %62 = vector.shape_cast %61 : vector<8xf32> to vector<8x1xf32>
    %63 = arith.addf %55, %62 : vector<8x1xf32>
    %c0_60 = arith.constant 0 : index
    %c2_61 = arith.constant 2 : index
    %c0_62 = arith.constant 0 : index
    %c0_63 = arith.constant 0 : index
    %64 = vector.load %arg3[%c0_60, %c2_61, %c0_62, %c0_63] : memref<1x4x8x256xf32, #tpu.memory_space<vmem>>, vector<1x1x8x256xf32>
    %65 = vector.shape_cast %64 : vector<1x1x8x256xf32> to vector<8x256xf32>
    %66 = vector.broadcast %46 : vector<8x1xf32> to vector<8x256xf32>
    %67 = arith.subf %65, %66 : vector<8x256xf32>
    %68 = arith.mulf %67, %67 : vector<8x256xf32>
    %cst_64 = arith.constant dense<0.000000e+00> : vector<8xf32>
    %69 = vector.multi_reduction <add>, %68, %cst_64 [1] : vector<8x256xf32> to vector<8xf32>
    %70 = vector.shape_cast %69 : vector<8xf32> to vector<8x1xf32>
    %71 = arith.addf %63, %70 : vector<8x1xf32>
    %c0_65 = arith.constant 0 : index
    %c3_66 = arith.constant 3 : index
    %c0_67 = arith.constant 0 : index
    %c0_68 = arith.constant 0 : index
    %72 = vector.load %arg3[%c0_65, %c3_66, %c0_67, %c0_68] : memref<1x4x8x256xf32, #tpu.memory_space<vmem>>, vector<1x1x8x256xf32>
    %73 = vector.shape_cast %72 : vector<1x1x8x256xf32> to vector<8x256xf32>
    %74 = vector.broadcast %46 : vector<8x1xf32> to vector<8x256xf32>
    %75 = arith.subf %73, %74 : vector<8x256xf32>
    %76 = arith.mulf %75, %75 : vector<8x256xf32>
    %cst_69 = arith.constant dense<0.000000e+00> : vector<8xf32>
    %77 = vector.multi_reduction <add>, %76, %cst_69 [1] : vector<8x256xf32> to vector<8xf32>
    %78 = vector.shape_cast %77 : vector<8xf32> to vector<8x1xf32>
    %79 = arith.addf %71, %78 : vector<8x1xf32>
    %cst_70 = arith.constant 9.765625E-4 : f32
    %80 = vector.broadcast %cst_70 : f32 to vector<8x1xf32>
    %81 = arith.mulf %79, %80 : vector<8x1xf32>
    %cst_71 = arith.constant 9.99999974E-6 : f32
    %82 = vector.broadcast %cst_71 : f32 to vector<8x1xf32>
    %83 = arith.addf %81, %82 : vector<8x1xf32>
    %84 = math.rsqrt %83 : vector<8x1xf32>
    %c0_72 = arith.constant 0 : index
    %c0_73 = arith.constant 0 : index
    %c0_74 = arith.constant 0 : index
    %c0_75 = arith.constant 0 : index
    %85 = vector.load %arg3[%c0_72, %c0_73, %c0_74, %c0_75] : memref<1x4x8x256xf32, #tpu.memory_space<vmem>>, vector<1x1x8x256xf32>
    %86 = vector.shape_cast %85 : vector<1x1x8x256xf32> to vector<8x256xf32>
    %87 = vector.broadcast %46 : vector<8x1xf32> to vector<8x256xf32>
    %88 = arith.subf %86, %87 : vector<8x256xf32>
    %89 = vector.broadcast %84 : vector<8x1xf32> to vector<8x256xf32>
    %90 = arith.mulf %88, %89 : vector<8x256xf32>
    %cst_76 = arith.constant 0.000000e+00 : f32
    %91 = vector.broadcast %cst_76 : f32 to vector<8x256xf32>
    %92 = arith.maximumf %90, %91 : vector<8x256xf32>
    %c0_77 = arith.constant 0 : index
    %c0_78 = arith.constant 0 : index
    %c0_79 = arith.constant 0 : index
    %c0_80 = arith.constant 0 : index
    %93 = vector.load %arg3[%c0_77, %c0_78, %c0_79, %c0_80] : memref<1x4x8x256xf32, #tpu.memory_space<vmem>>, vector<1x1x8x256xf32>
    %94 = vector.shape_cast %93 : vector<1x1x8x256xf32> to vector<8x256xf32>
    %95 = vector.shape_cast %92 : vector<8x256xf32> to vector<1x1x8x256xf32>
    tpu.vector_store %arg3[%c0_77, %c0_78, %c0_79, %c0_80], %95 {strides = array<i32>} : memref<1x4x8x256xf32, #tpu.memory_space<vmem>>, vector<1x1x8x256xf32>,
    %c0_81 = arith.constant 0 : index
    %c1_82 = arith.constant 1 : index
    %c0_83 = arith.constant 0 : index
    %c0_84 = arith.constant 0 : index
    %96 = vector.load %arg3[%c0_81, %c1_82, %c0_83, %c0_84] : memref<1x4x8x256xf32, #tpu.memory_space<vmem>>, vector<1x1x8x256xf32>
    %97 = vector.shape_cast %96 : vector<1x1x8x256xf32> to vector<8x256xf32>
    %98 = vector.broadcast %46 : vector<8x1xf32> to vector<8x256xf32>
    %99 = arith.subf %97, %98 : vector<8x256xf32>
    %100 = vector.broadcast %84 : vector<8x1xf32> to vector<8x256xf32>
    %101 = arith.mulf %99, %100 : vector<8x256xf32>
    %cst_85 = arith.constant 0.000000e+00 : f32
    %102 = vector.broadcast %cst_85 : f32 to vector<8x256xf32>
    %103 = arith.maximumf %101, %102 : vector<8x256xf32>
    %c0_86 = arith.constant 0 : index
    %c1_87 = arith.constant 1 : index
    %c0_88 = arith.constant 0 : index
    %c0_89 = arith.constant 0 : index
    %104 = vector.load %arg3[%c0_86, %c1_87, %c0_88, %c0_89] : memref<1x4x8x256xf32, #tpu.memory_space<vmem>>, vector<1x1x8x256xf32>
    %105 = vector.shape_cast %104 : vector<1x1x8x256xf32> to vector<8x256xf32>
    %106 = vector.shape_cast %103 : vector<8x256xf32> to vector<1x1x8x256xf32>
    tpu.vector_store %arg3[%c0_86, %c1_87, %c0_88, %c0_89], %106 {strides = array<i32>} : memref<1x4x8x256xf32, #tpu.memory_space<vmem>>, vector<1x1x8x256xf32>,
    %c0_90 = arith.constant 0 : index
    %c2_91 = arith.constant 2 : index
    %c0_92 = arith.constant 0 : index
    %c0_93 = arith.constant 0 : index
    %107 = vector.load %arg3[%c0_90, %c2_91, %c0_92, %c0_93] : memref<1x4x8x256xf32, #tpu.memory_space<vmem>>, vector<1x1x8x256xf32>
    %108 = vector.shape_cast %107 : vector<1x1x8x256xf32> to vector<8x256xf32>
    %109 = vector.broadcast %46 : vector<8x1xf32> to vector<8x256xf32>
    %110 = arith.subf %108, %109 : vector<8x256xf32>
    %111 = vector.broadcast %84 : vector<8x1xf32> to vector<8x256xf32>
    %112 = arith.mulf %110, %111 : vector<8x256xf32>
    %cst_94 = arith.constant 0.000000e+00 : f32
    %113 = vector.broadcast %cst_94 : f32 to vector<8x256xf32>
    %114 = arith.maximumf %112, %113 : vector<8x256xf32>
    %c0_95 = arith.constant 0 : index
    %c2_96 = arith.constant 2 : index
    %c0_97 = arith.constant 0 : index
    %c0_98 = arith.constant 0 : index
    %115 = vector.load %arg3[%c0_95, %c2_96, %c0_97, %c0_98] : memref<1x4x8x256xf32, #tpu.memory_space<vmem>>, vector<1x1x8x256xf32>
    %116 = vector.shape_cast %115 : vector<1x1x8x256xf32> to vector<8x256xf32>
    %117 = vector.shape_cast %114 : vector<8x256xf32> to vector<1x1x8x256xf32>
    tpu.vector_store %arg3[%c0_95, %c2_96, %c0_97, %c0_98], %117 {strides = array<i32>} : memref<1x4x8x256xf32, #tpu.memory_space<vmem>>, vector<1x1x8x256xf32>,
    %c0_99 = arith.constant 0 : index
    %c3_100 = arith.constant 3 : index
    %c0_101 = arith.constant 0 : index
    %c0_102 = arith.constant 0 : index
    %118 = vector.load %arg3[%c0_99, %c3_100, %c0_101, %c0_102] : memref<1x4x8x256xf32, #tpu.memory_space<vmem>>, vector<1x1x8x256xf32>
    %119 = vector.shape_cast %118 : vector<1x1x8x256xf32> to vector<8x256xf32>
    %120 = vector.broadcast %46 : vector<8x1xf32> to vector<8x256xf32>
    %121 = arith.subf %119, %120 : vector<8x256xf32>
    %122 = vector.broadcast %84 : vector<8x1xf32> to vector<8x256xf32>
    %123 = arith.mulf %121, %122 : vector<8x256xf32>
    %cst_103 = arith.constant 0.000000e+00 : f32
    %124 = vector.broadcast %cst_103 : f32 to vector<8x256xf32>
    %125 = arith.maximumf %123, %124 : vector<8x256xf32>
    %c0_104 = arith.constant 0 : index
    %c3_105 = arith.constant 3 : index
    %c0_106 = arith.constant 0 : index
    %c0_107 = arith.constant 0 : index
    %126 = vector.load %arg3[%c0_104, %c3_105, %c0_106, %c0_107] : memref<1x4x8x256xf32, #tpu.memory_space<vmem>>, vector<1x1x8x256xf32>
    %127 = vector.shape_cast %126 : vector<1x1x8x256xf32> to vector<8x256xf32>
    %128 = vector.shape_cast %125 : vector<8x256xf32> to vector<1x1x8x256xf32>
    tpu.vector_store %arg3[%c0_104, %c3_105, %c0_106, %c0_107], %128 {strides = array<i32>} : memref<1x4x8x256xf32, #tpu.memory_space<vmem>>, vector<1x1x8x256xf32>,
    return
  }
  func.func @transform_0(%arg0: i32) -> (i32, i32, i32, i32) {
    %c0_i32 = arith.constant 0 : i32
    %c0_i32_0 = arith.constant 0 : i32
    %c0_i32_1 = arith.constant 0 : i32
    %c0_i32_2 = arith.constant 0 : i32
    return %arg0, %c0_i32, %c0_i32_0, %c0_i32_1 : i32, i32, i32, i32
  }
  func.func @transform_1(%arg0: i32) -> (i32, i32, i32) {
    %c0_i32 = arith.constant 0 : i32
    %c0_i32_0 = arith.constant 0 : i32
    %c0_i32_1 = arith.constant 0 : i32
    %c0_i32_2 = arith.constant 0 : i32
    return %c0_i32, %c0_i32_0, %c0_i32_1 : i32, i32, i32
  }
  func.func @transform_2(%arg0: i32) -> (i32, i32, i32, i32) {
    %c0_i32 = arith.constant 0 : i32
    %c0_i32_0 = arith.constant 0 : i32
    %c0_i32_1 = arith.constant 0 : i32
    %c0_i32_2 = arith.constant 0 : i32
    return %arg0, %c0_i32, %c0_i32_0, %c0_i32_1 : i32, i32, i32, i32
  }
}

</mosaic_0001>

<llo_original>
// kernel: unet_upblock_forward.1
$region0: #{unet_upblock_forward.1}
  #allocation0 [shape = 'u32[]', space=smem, size = 0x4, offset = 0x4, fixed_abs, tag = 'smem constant byte address 0x4 - core index']
  #allocation1 [shape = 'u32[144,128]{1,0:T(1,128)}', space=vmem, size = 0x12000, scoped, tag = 'internal scratch']
  %s0 = inlined_call_operand.vmem [shape: bf16[2,4,16,256], index: 0, kind: input, shape index: {}]
  %s1 = inlined_call_operand.vmem [shape: bf16[4,8,16], index: 1, kind: input, shape index: {}]
  %s2 = inlined_call_operand.vmem [shape: f32[2,4,8,256], index: 2, kind: output, shape index: {}]
  %s3 = sld [smem:[#allocation0]]
  $region41: #{unet_upblock_forward.1} parent=0
    _
  %s5 = ssub.s32 1, %s3
  %s6 = scalar_select 0, %s5, %s3
  loop: start=0, step=1, limit=4
  $region2: #{unet_upblock_forward.1} parent=0 // loop_pre_header
    _
  $region3: #{unet_upblock_forward.1} parent=0 // loop_header
    %s8 = sphi 0, %s12
    %p9 = scmp.ge.s32.totalorder %s8, 4
    %s18 = sphi 0, %s20
    %s21 = sphi 0, %s18
    %s22 = sphi 0, %s21
    %s38 = sphi 0, %s22
    %s42 = sphi 0, %s42
    %s44 = sphi 0, %s42
    %s45 = sphi 0, %s44
    %s59 = sphi 0, %s45
    %s65 = sphi 0, %s67
    %s68 = sphi 0, %s65
    %s69 = sphi 0, %s68
    %s85 = sphi 0, %s69
  $region4: #{unet_upblock_forward.1} parent=0 // loop_header_branch
    %11 = sbr.rel (%p9) target = $region8
  $region5: #{unet_upblock_forward.1} parent=0 // loop_body
    %s13 = ssub.s32 %s8, 1
    %s14 = ssub.s32 %s8, 2
    %s15 = sadd.s32 %s8, 1
    %s16 = ssub.s32 %s8, %s15
    %p17 = scmp.eq.s32.totalorder %s16, 0
    %s19 = sadd.s32 %s18, 1
    %s20 = scalar_select %p17, %s18, %s19
    %p23 = pneg %p17
    %p24 = scmp.eq.s32.totalorder %s8, 1
    %p25 = por %p23, %p24
    %p26 = scmp.ne.s32.totalorder %s18, %s21
    %p27 = scmp.eq.s32.totalorder %s8, 0
    %p28 = por %p26, %p27
    %p29 = scmp.ne.s32.totalorder %s18, %s21
    %p30 = scmp.eq.s32.totalorder %s13, 1
    %p31 = por %p29, %p30
    %p32 = scmp.ne.s32.totalorder %s21, %s22
    %p33 = scmp.eq.s32.totalorder %s13, 0
    %p34 = por %p32, %p33
    %p35 = scmp.ne.s32.totalorder %s21, %s22
    %p36 = scmp.eq.s32.totalorder %s14, 1
    %p37 = por %p35, %p36
    %p39 = scmp.ne.s32.totalorder %s22, %s38
    %p40 = scmp.eq.s32.totalorder %s14, 0
    %p41 = por %p39, %p40
    %s43 = sadd.s32 %s42, 1
    %p46 = scmp.eq.s32.totalorder %s8, 1
    %p47 = scmp.ne.s32.totalorder %s42, %s44
    %p48 = scmp.eq.s32.totalorder %s8, 0
    %p49 = por %p47, %p48
    %p50 = scmp.ne.s32.totalorder %s42, %s44
    %p51 = scmp.eq.s32.totalorder %s13, 1
    %p52 = por %p50, %p51
    %p53 = scmp.ne.s32.totalorder %s44, %s45
    %p54 = scmp.eq.s32.totalorder %s13, 0
    %p55 = por %p53, %p54
    %p56 = scmp.ne.s32.totalorder %s44, %s45
    %p57 = scmp.eq.s32.totalorder %s14, 1
    %p58 = por %p56, %p57
    %p60 = scmp.ne.s32.totalorder %s45, %s59
    %p61 = scmp.eq.s32.totalorder %s14, 0
    %p62 = por %p60, %p61
    %s63 = ssub.s32 %s8, %s15
    %p64 = scmp.eq.s32.totalorder %s63, 0
    %s66 = sadd.s32 %s65, 1
    %s67 = scalar_select %p64, %s65, %s66
    %p70 = pneg %p64
    %p71 = scmp.eq.s32.totalorder %s8, 1
    %p72 = por %p70, %p71
    %p73 = scmp.ne.s32.totalorder %s65, %s68
    %p74 = scmp.eq.s32.totalorder %s8, 0
    %p75 = por %p73, %p74
    %p76 = scmp.ne.s32.totalorder %s65, %s68
    %p77 = scmp.eq.s32.totalorder %s13, 1
    %p78 = por %p76, %p77
    %p79 = scmp.ne.s32.totalorder %s68, %s69
    %p80 = scmp.eq.s32.totalorder %s13, 0
    %p81 = por %p79, %p80
    %p82 = scmp.ne.s32.totalorder %s68, %s69
    %p83 = scmp.eq.s32.totalorder %s14, 1
    %p84 = por %p82, %p83
    %p86 = scmp.ne.s32.totalorder %s69, %s85
    %p87 = scmp.eq.s32.totalorder %s14, 0
    %p88 = por %p86, %p87
    %p89 = scmp.le.s32.totalorder 1, %s8
    %p90 = scmp.lt.s32.totalorder %s8, 3
    %p91 = pnand %p89, %p90
    %p92 = pneg %p91
    // Predicated region
    $region9: #{unet_upblock_forward.1} parent=5 // pred_check
      _
    $region10: #{unet_upblock_forward.1} parent=5 // pred_check_branch
      %94 = sbr.rel (%p91) target = $region12
    $region11: #{unet_upblock_forward.1} parent=5 // pred_region
      %s95 = ssub.s32 %s8, 1
      // Predicated region
      $region13: #{unet_upblock_forward.1} parent=11 // pred_check
        %p96 = pneg %p55
      $region14: #{unet_upblock_forward.1} parent=11 // pred_check_branch
        %98 = sbr.rel (%p96) target = $region16
      $region15: #{unet_upblock_forward.1} parent=11 // pred_region
        _
      $region16: #{unet_upblock_forward.1} parent=11 // pred_fallthru
        _
    $region12: #{unet_upblock_forward.1} parent=5 // pred_fallthru
      _
    %p99 = scmp.lt.s32.totalorder %s8, 2
    // Predicated region
    $region17: #{unet_upblock_forward.1} parent=5 // pred_check
      %p100 = pneg %p99
    $region18: #{unet_upblock_forward.1} parent=5 // pred_check_branch
      %102 = sbr.rel (%p100) target = $region20
    $region19: #{unet_upblock_forward.1} parent=5 // pred_region
      // Predicated region
      $region21: #{unet_upblock_forward.1} parent=19 // pred_check
        %p103 = pneg %p28
      $region22: #{unet_upblock_forward.1} parent=19 // pred_check_branch
        %105 = sbr.rel (%p103) target = $region24
      $region23: #{unet_upblock_forward.1} parent=19 // pred_region
        %p106 = scmp.lt.s32.totalorder %s8, 1
        %s107 = scalar_select %p106, %s8, 1
        %s108 = smul.addr %s107, 16
        %s109 = smul.addr %s108, 4
        %s110 = scalar_lea.vmem %s0, %s109
      $region24: #{unet_upblock_forward.1} parent=19 // pred_fallthru
        _
    $region20: #{unet_upblock_forward.1} parent=5 // pred_fallthru
      _
    %p111 = scmp.le.s32.totalorder 1, %s8
    %p112 = scmp.lt.s32.totalorder %s8, 3
    %p113 = pnand %p111, %p112
    %p114 = pneg %p113
    // Predicated region
    $region25: #{unet_upblock_forward.1} parent=5 // pred_check
      _
    $region26: #{unet_upblock_forward.1} parent=5 // pred_check_branch
      %116 = sbr.rel (%p113) target = $region28
    $region27: #{unet_upblock_forward.1} parent=5 // pred_region
      %s117 = ssub.s32 %s8, 1
      %p118 = scmp.lt.s32.totalorder %s13, 1
      %s119 = scalar_select %p118, %s13, 1
      %s120 = smul.addr %s119, 16
      %s121 = smul.addr %s120, 4
      %s122 = scalar_lea.vmem %s0, %s121
      %p123 = pneg %p34
      %p124 = pneg %p31
      %p125 = pneg %p55
      %p126 = pneg %p52
      %p127 = pneg %p81
      %p128 = pneg %p78
      %p129 = scmp.lt.s32.totalorder %s13, 1
      %s130 = scalar_select %p129, %s13, 1
      %s131 = smul.addr %s130, 8
      %s132 = smul.addr %s131, 8
      %s133 = scalar_lea.vmem %s2, %s132
      %p134 = scmp.lt.s32.totalorder %s13, 1
      %s135 = scalar_select %p134, %s13, 1
      %s136 = smul.addr %s135, 16
      %s137 = smul.addr %s136, 4
      %s138 = scalar_lea.vmem %s0, %s137
      %p139 = scmp.lt.s32.totalorder %s13, 1
      %s140 = scalar_select %p139, %s13, 1
      %s141 = smul.addr %s140, 8
      %s142 = smul.addr %s141, 8
      %s143 = scalar_lea.vmem %s2, %s142
      %v145 = vld [vmem:[%s1] sm:$0xf]
      %v146 = vld [vmem:[%s138] sm:$0xff]
      %v147 = vld [vmem:[%s138 + $0x8] sm:$0xff]
      %v150 = vunpack.c.l.b16 %v146
      %v151 = vunpack.c.h.b16 %v146
      %v152 = vunpack.c.l.b16 %v147
      %v153 = vunpack.c.h.b16 %v147
      %v154 = vpack.c.b16 %v152, %v150
      %v155 = vpack.c.b16 %v153, %v151
      %vm158 = vcmask 130048
      %v160 = vsel %vm158, %v145, 0
      %162 = vmatprep.subr.bf16.mxu0 0
      %163 = vmatpush1.bf16.msra.mxu0 0
      %164 = vmatprep.subr.bf16.mxu0 0
      %165 = vmatpush1.bf16.msra.mxu0 0
      %166 = vmatprep.subr.bf16.mxu0 0
      %167 = vmatpush1.bf16.msra.mxu0 0
      %168 = vmatprep.subr.bf16.mxu0 0
      %169 = vmatpush1.bf16.msra.mxu0 0
      %170 = vmatprep.subr.bf16.mxu0 0
      %171 = vmatpush1.bf16.msra.mxu0 0
      %172 = vmatprep.subr.bf16.mxu0 0
      %173 = vmatpush1.bf16.msra.mxu0 0
      %174 = vmatprep.subr.bf16.mxu0 0
      %175 = vmatpush1.bf16.msra.mxu0 0
      %176 = vmatprep.subr.bf16.mxu0 %v155
      %177 = vmatpush1.bf16.msra.mxu0 %v154
      %178 = vmatprep.subr.bf16.mxu0 0
      %179 = vmatpush2.bf16.msra.mxu0 0
      %180 = vmatprep.subr.bf16.mxu0 0
      %181 = vmatpush2.bf16.msra.mxu0 0
      %182 = vmatprep.subr.bf16.mxu0 0
      %183 = vmatpush2.bf16.msra.mxu0 0
      %184 = vmatprep.subr.bf16.mxu0 0
      %185 = vmatpush2.bf16.msra.mxu0 0
      %186 = vmatprep.subr.bf16.mxu0 0
      %187 = vmatpush2.bf16.msra.mxu0 0
      %188 = vmatprep.subr.bf16.mxu0 0
      %189 = vmatpush2.bf16.msra.mxu0 0
      %190 = vmatprep.subr.bf16.mxu0 0
      %191 = vmatpush2.bf16.msra.mxu0 0
      %192 = vmatprep.subr.bf16.mxu0 0
      %193 = vmatpush2.bf16.msra.mxu0 0
      %194 = vmatprep.mubr.bf16.mxu0 0
      %195 = vmatmul.mubr.bf16.gmra.mxu0 %v160
      %v196 = vpop.f32.mrf.mxu0
      %v197 = vadd.f32 0.0, %v196
      %v198 = vpop.f32.mrf.mxu0
      %v199 = vadd.f32 0.0, %v198
      %v200 = vpop.f32.mrf.mxu0
      %v201 = vpop.f32.mrf.mxu0
      %202 = vdwg.mxu0
      %203 = vst [vmem:[%s143] sm:$0xff] %v197
      %204 = vst [vmem:[%s143 + $0x8] sm:$0xff] %v199
      %v205 = vadd.f32 %v197, %v199
      %206 = vadd.xlane.f32.xlu0 %v205
      %v207 = vpop.xlane.xlu0 %206
      %v208 = vadd.f32 %v207, 0.0
      %s209 = scalar_lea.vmem %s1, 4
      %v210 = vld [vmem:[%s209] sm:$0xf]
      %s211 = scalar_lea.vmem %s138, 16
      %v212 = vld [vmem:[%s211] sm:$0xff]
      %v213 = vld [vmem:[%s211 + $0x8] sm:$0xff]
      %v216 = vunpack.c.l.b16 %v212
      %v217 = vunpack.c.h.b16 %v212
      %v218 = vunpack.c.l.b16 %v213
      %v219 = vunpack.c.h.b16 %v213
      %v220 = vpack.c.b16 %v218, %v216
      %v221 = vpack.c.b16 %v219, %v217
      %v225 = vsel %vm158, %v210, 0
      %227 = vmatprep.subr.bf16.mxu0 0
      %228 = vmatpush1.bf16.msra.mxu0 0
      %229 = vmatprep.subr.bf16.mxu0 0
      %230 = vmatpush1.bf16.msra.mxu0 0
      %231 = vmatprep.subr.bf16.mxu0 0
      %232 = vmatpush1.bf16.msra.mxu0 0
      %233 = vmatprep.subr.bf16.mxu0 0
      %234 = vmatpush1.bf16.msra.mxu0 0
      %235 = vmatprep.subr.bf16.mxu0 0
      %236 = vmatpush1.bf16.msra.mxu0 0
      %237 = vmatprep.subr.bf16.mxu0 0
      %238 = vmatpush1.bf16.msra.mxu0 0
      %239 = vmatprep.subr.bf16.mxu0 0
      %240 = vmatpush1.bf16.msra.mxu0 0
      %241 = vmatprep.subr.bf16.mxu0 %v221
      %242 = vmatpush1.bf16.msra.mxu0 %v220
      %243 = vmatprep.subr.bf16.mxu0 0
      %244 = vmatpush2.bf16.msra.mxu0 0
      %245 = vmatprep.subr.bf16.mxu0 0
      %246 = vmatpush2.bf16.msra.mxu0 0
      %247 = vmatprep.subr.bf16.mxu0 0
      %248 = vmatpush2.bf16.msra.mxu0 0
      %249 = vmatprep.subr.bf16.mxu0 0
      %250 = vmatpush2.bf16.msra.mxu0 0
      %251 = vmatprep.subr.bf16.mxu0 0
      %252 = vmatpush2.bf16.msra.mxu0 0
      %253 = vmatprep.subr.bf16.mxu0 0
      %254 = vmatpush2.bf16.msra.mxu0 0
      %255 = vmatprep.subr.bf16.mxu0 0
      %256 = vmatpush2.bf16.msra.mxu0 0
      %257 = vmatprep.subr.bf16.mxu0 0
      %258 = vmatpush2.bf16.msra.mxu0 0
      %259 = vmatprep.mubr.bf16.mxu0 0
      %260 = vmatmul.mubr.bf16.gmra.mxu0 %v225
      %v261 = vpop.f32.mrf.mxu0
      %v262 = vadd.f32 0.0, %v261
      %v263 = vpop.f32.mrf.mxu0
      %v264 = vadd.f32 0.0, %v263
      %v265 = vpop.f32.mrf.mxu0
      %v266 = vpop.f32.mrf.mxu0
      %267 = vdwg.mxu0
      %s268 = scalar_lea.vmem %s143, 16
      %269 = vst [vmem:[%s268] sm:$0xff] %v262
      %270 = vst [vmem:[%s268 + $0x8] sm:$0xff] %v264
      %v271 = vadd.f32 %v262, %v264
      %272 = vadd.xlane.f32.xlu0 %v271
      %v273 = vpop.xlane.xlu0 %272
      %v274 = vadd.f32 %v208, %v273
      %s275 = scalar_lea.vmem %s1, 8
      %v276 = vld [vmem:[%s275] sm:$0xf]
      %s277 = scalar_lea.vmem %s138, 32
      %v278 = vld [vmem:[%s277] sm:$0xff]
      %v279 = vld [vmem:[%s277 + $0x8] sm:$0xff]
      %v282 = vunpack.c.l.b16 %v278
      %v283 = vunpack.c.h.b16 %v278
      %v284 = vunpack.c.l.b16 %v279
      %v285 = vunpack.c.h.b16 %v279
      %v286 = vpack.c.b16 %v284, %v282
      %v287 = vpack.c.b16 %v285, %v283
      %v291 = vsel %vm158, %v276, 0
      %293 = vmatprep.subr.bf16.mxu0 0
      %294 = vmatpush1.bf16.msra.mxu0 0
      %295 = vmatprep.subr.bf16.mxu0 0
      %296 = vmatpush1.bf16.msra.mxu0 0
      %297 = vmatprep.subr.bf16.mxu0 0
      %298 = vmatpush1.bf16.msra.mxu0 0
      %299 = vmatprep.subr.bf16.mxu0 0
      %300 = vmatpush1.bf16.msra.mxu0 0
      %301 = vmatprep.subr.bf16.mxu0 0
      %302 = vmatpush1.bf16.msra.mxu0 0
      %303 = vmatprep.subr.bf16.mxu0 0
      %304 = vmatpush1.bf16.msra.mxu0 0
      %305 = vmatprep.subr.bf16.mxu0 0
      %306 = vmatpush1.bf16.msra.mxu0 0
      %307 = vmatprep.subr.bf16.mxu0 %v287
      %308 = vmatpush1.bf16.msra.mxu0 %v286
      %309 = vmatprep.subr.bf16.mxu0 0
      %310 = vmatpush2.bf16.msra.mxu0 0
      %311 = vmatprep.subr.bf16.mxu0 0
      %312 = vmatpush2.bf16.msra.mxu0 0
      %313 = vmatprep.subr.bf16.mxu0 0
      %314 = vmatpush2.bf16.msra.mxu0 0
      %315 = vmatprep.subr.bf16.mxu0 0
      %316 = vmatpush2.bf16.msra.mxu0 0
      %317 = vmatprep.subr.bf16.mxu0 0
      %318 = vmatpush2.bf16.msra.mxu0 0
      %319 = vmatprep.subr.bf16.mxu0 0
      %320 = vmatpush2.bf16.msra.mxu0 0
      %321 = vmatprep.subr.bf16.mxu0 0
      %322 = vmatpush2.bf16.msra.mxu0 0
      %323 = vmatprep.subr.bf16.mxu0 0
      %324 = vmatpush2.bf16.msra.mxu0 0
      %325 = vmatprep.mubr.bf16.mxu0 0
      %326 = vmatmul.mubr.bf16.gmra.mxu0 %v291
      %v327 = vpop.f32.mrf.mxu0
      %v328 = vadd.f32 0.0, %v327
      %v329 = vpop.f32.mrf.mxu0
      %v330 = vadd.f32 0.0, %v329
      %v331 = vpop.f32.mrf.mxu0
      %v332 = vpop.f32.mrf.mxu0
      %333 = vdwg.mxu0
      %s334 = scalar_lea.vmem %s143, 32
      %335 = vst [vmem:[%s334] sm:$0xff] %v328
      %336 = vst [vmem:[%s334 + $0x8] sm:$0xff] %v330
      %v337 = vadd.f32 %v328, %v330
      %338 = vadd.xlane.f32.xlu0 %v337
      %v339 = vpop.xlane.xlu0 %338
      %v340 = vadd.f32 %v274, %v339
      %s341 = scalar_lea.vmem %s1, 12
      %v342 = vld [vmem:[%s341] sm:$0xf]
      %s343 = scalar_lea.vmem %s138, 48
      %v344 = vld [vmem:[%s343] sm:$0xff]
      %v345 = vld [vmem:[%s343 + $0x8] sm:$0xff]
      %v348 = vunpack.c.l.b16 %v344
      %v349 = vunpack.c.h.b16 %v344
      %v350 = vunpack.c.l.b16 %v345
      %v351 = vunpack.c.h.b16 %v345
      %v352 = vpack.c.b16 %v350, %v348
      %v353 = vpack.c.b16 %v351, %v349
      %v357 = vsel %vm158, %v342, 0
      %359 = vmatprep.subr.bf16.mxu0 0
      %360 = vmatpush1.bf16.msra.mxu0 0
      %361 = vmatprep.subr.bf16.mxu0 0
      %362 = vmatpush1.bf16.msra.mxu0 0
      %363 = vmatprep.subr.bf16.mxu0 0
      %364 = vmatpush1.bf16.msra.mxu0 0
      %365 = vmatprep.subr.bf16.mxu0 0
      %366 = vmatpush1.bf16.msra.mxu0 0
      %367 = vmatprep.subr.bf16.mxu0 0
      %368 = vmatpush1.bf16.msra.mxu0 0
      %369 = vmatprep.subr.bf16.mxu0 0
      %370 = vmatpush1.bf16.msra.mxu0 0
      %371 = vmatprep.subr.bf16.mxu0 0
      %372 = vmatpush1.bf16.msra.mxu0 0
      %373 = vmatprep.subr.bf16.mxu0 %v353
      %374 = vmatpush1.bf16.msra.mxu0 %v352
      %375 = vmatprep.subr.bf16.mxu0 0
      %376 = vmatpush2.bf16.msra.mxu0 0
      %377 = vmatprep.subr.bf16.mxu0 0
      %378 = vmatpush2.bf16.msra.mxu0 0
      %379 = vmatprep.subr.bf16.mxu0 0
      %380 = vmatpush2.bf16.msra.mxu0 0
      %381 = vmatprep.subr.bf16.mxu0 0
      %382 = vmatpush2.bf16.msra.mxu0 0
      %383 = vmatprep.subr.bf16.mxu0 0
      %384 = vmatpush2.bf16.msra.mxu0 0
      %385 = vmatprep.subr.bf16.mxu0 0
      %386 = vmatpush2.bf16.msra.mxu0 0
      %387 = vmatprep.subr.bf16.mxu0 0
      %388 = vmatpush2.bf16.msra.mxu0 0
      %389 = vmatprep.subr.bf16.mxu0 0
      %390 = vmatpush2.bf16.msra.mxu0 0
      %391 = vmatprep.mubr.bf16.mxu0 0
      %392 = vmatmul.mubr.bf16.gmra.mxu0 %v357
      %v393 = vpop.f32.mrf.mxu0
      %v394 = vadd.f32 0.0, %v393
      %v395 = vpop.f32.mrf.mxu0
      %v396 = vadd.f32 0.0, %v395
      %v397 = vpop.f32.mrf.mxu0
      %v398 = vpop.f32.mrf.mxu0
      %399 = vdwg.mxu0
      %s400 = scalar_lea.vmem %s143, 48
      %401 = vst [vmem:[%s400] sm:$0xff] %v394
      %402 = vst [vmem:[%s400 + $0x8] sm:$0xff] %v396
      %v403 = vadd.f32 %v394, %v396
      %404 = vadd.xlane.f32.xlu0 %v403
      %v405 = vpop.xlane.xlu0 %404
      %v406 = vadd.f32 %v340, %v405
      %v407 = vmul.f32 %v406, 0.0009765625
      %v408 = vld [vmem:[%s143] sm:$0xff]
      %v409 = vld [vmem:[%s143 + $0x8] sm:$0xff]
      %v410 = vsub.f32 %v408, %v407
      %v411 = vsub.f32 %v409, %v407
      %v412 = vmul.f32 %v410, %v410
      %v413 = vmul.f32 %v411, %v411
      %v414 = vadd.f32 %v412, %v413
      %415 = vadd.xlane.f32.xlu0 %v414
      %v416 = vpop.xlane.xlu0 %415
      %v417 = vadd.f32 %v416, 0.0
      %v418 = vld [vmem:[%s268] sm:$0xff]
      %v419 = vld [vmem:[%s268 + $0x8] sm:$0xff]
      %v420 = vsub.f32 %v418, %v407
      %v421 = vsub.f32 %v419, %v407
      %v422 = vmul.f32 %v420, %v420
      %v423 = vmul.f32 %v421, %v421
      %v424 = vadd.f32 %v422, %v423
      %425 = vadd.xlane.f32.xlu0 %v424
      %v426 = vpop.xlane.xlu0 %425
      %v427 = vadd.f32 %v417, %v426
      %v428 = vld [vmem:[%s334] sm:$0xff]
      %v429 = vld [vmem:[%s334 + $0x8] sm:$0xff]
      %v430 = vsub.f32 %v428, %v407
      %v431 = vsub.f32 %v429, %v407
      %v432 = vmul.f32 %v430, %v430
      %v433 = vmul.f32 %v431, %v431
      %v434 = vadd.f32 %v432, %v433
      %435 = vadd.xlane.f32.xlu0 %v434
      %v436 = vpop.xlane.xlu0 %435
      %v437 = vadd.f32 %v427, %v436
      %v438 = vld [vmem:[%s400] sm:$0xff]
      %v439 = vld [vmem:[%s400 + $0x8] sm:$0xff]
      %v440 = vsub.f32 %v438, %v407
      %v441 = vsub.f32 %v439, %v407
      %v442 = vmul.f32 %v440, %v440
      %v443 = vmul.f32 %v441, %v441
      %v444 = vadd.f32 %v442, %v443
      %445 = vadd.xlane.f32.xlu0 %v444
      %v446 = vpop.xlane.xlu0 %445
      %v447 = vadd.f32 %v437, %v446
      %v448 = vmul.f32 %v447, 0.0009765625
      %v449 = vadd.f32 %v448, 1e-05
      %v450 = vrsqrt.pop %v449
      %v451 = vmul.f32 %v410, %v450
      %v452 = vmul.f32 %v411, %v450
      %v453 = vmax.f32 %v451, 0.0
      %v454 = vmax.f32 %v452, 0.0
      %455 = vst [vmem:[%s143] sm:$0xff] %v453
      %456 = vst [vmem:[%s143 + $0x8] sm:$0xff] %v454
      %v457 = vld [vmem:[%s268] sm:$0xff]
      %v458 = vld [vmem:[%s268 + $0x8] sm:$0xff]
      %v459 = vsub.f32 %v457, %v407
      %v460 = vsub.f32 %v458, %v407
      %v461 = vmul.f32 %v459, %v450
      %v462 = vmul.f32 %v460, %v450
      %v463 = vmax.f32 %v461, 0.0
      %v464 = vmax.f32 %v462, 0.0
      %465 = vst [vmem:[%s268] sm:$0xff] %v463
      %466 = vst [vmem:[%s268 + $0x8] sm:$0xff] %v464
      %v467 = vld [vmem:[%s334] sm:$0xff]
      %v468 = vld [vmem:[%s334 + $0x8] sm:$0xff]
      %v469 = vsub.f32 %v467, %v407
      %v470 = vsub.f32 %v468, %v407
      %v471 = vmul.f32 %v469, %v450
      %v472 = vmul.f32 %v470, %v450
      %v473 = vmax.f32 %v471, 0.0
      %v474 = vmax.f32 %v472, 0.0
      %475 = vst [vmem:[%s334] sm:$0xff] %v473
      %476 = vst [vmem:[%s334 + $0x8] sm:$0xff] %v474
      %v477 = vld [vmem:[%s400] sm:$0xff]
      %v478 = vld [vmem:[%s400 + $0x8] sm:$0xff]
      %v479 = vsub.f32 %v477, %v407
      %v480 = vsub.f32 %v478, %v407
      %v481 = vmul.f32 %v479, %v450
      %v482 = vmul.f32 %v480, %v450
      %v483 = vmax.f32 %v481, 0.0
      %v484 = vmax.f32 %v482, 0.0
      %485 = vst [vmem:[%s400] sm:$0xff] %v483
      %486 = vst [vmem:[%s400 + $0x8] sm:$0xff] %v484
      %p487 = scmp.lt.s32.totalorder %s13, 1
      %s488 = scalar_select %p487, %s13, 1
      %s489 = smul.addr %s488, 8
      %s490 = smul.addr %s489, 8
      %s491 = scalar_lea.vmem %s2, %s490
      // Predicated region
      $region29: #{unet_upblock_forward.1} parent=27 // pred_check
        %p492 = pneg %p78
      $region30: #{unet_upblock_forward.1} parent=27 // pred_check_branch
        %494 = sbr.rel (%p492) target = $region32
      $region31: #{unet_upblock_forward.1} parent=27 // pred_region
        _
      $region32: #{unet_upblock_forward.1} parent=27 // pred_fallthru
        _
    $region28: #{unet_upblock_forward.1} parent=5 // pred_fallthru
      _
    %p495 = scmp.le.s32.totalorder 2, %s8
    // Predicated region
    $region33: #{unet_upblock_forward.1} parent=5 // pred_check
      %p496 = pneg %p495
    $region34: #{unet_upblock_forward.1} parent=5 // pred_check_branch
      %498 = sbr.rel (%p496) target = $region36
    $region35: #{unet_upblock_forward.1} parent=5 // pred_region
      %s499 = ssub.s32 %s8, 2
      // Predicated region
      $region37: #{unet_upblock_forward.1} parent=35 // pred_check
        %p500 = pneg %p84
      $region38: #{unet_upblock_forward.1} parent=35 // pred_check_branch
        %502 = sbr.rel (%p500) target = $region40
      $region39: #{unet_upblock_forward.1} parent=35 // pred_region
        %p503 = scmp.lt.s32.totalorder %s14, 1
        %s504 = scalar_select %p503, %s14, 1
        %s505 = smul.addr %s504, 8
        %s506 = smul.addr %s505, 8
        %s507 = scalar_lea.vmem %s2, %s506
      $region40: #{unet_upblock_forward.1} parent=35 // pred_fallthru
        _
    $region36: #{unet_upblock_forward.1} parent=5 // pred_fallthru
      _
  $region6: #{unet_upblock_forward.1} parent=0 // loop_footer
    %s12 = sadd.s32 1, %s8
  $region7: #{unet_upblock_forward.1} parent=0 // loop_footer_branch
    %7 = sbr.rel target = $region3
  $region8: #{unet_upblock_forward.1} parent=0 // loop_exit
    _

</llo_original>
